<compile_context>
chip_gen: v5e
topology: v5e:2x2
jax: 0.10.0
libtpu: 0.0.40
codegen_flags: <defaults>
</compile_context>

<pallas_src>
import jax
import jax.numpy as jnp
from jax.experimental import pallas as pl
from jax.experimental.pallas import tpu as pltpu

ALPHA = 0.75
GAMMA = 2  # statically 2 -> exact square instead of pow


def focal_loss_kernel(scalars_ref, logits_ref, targets_ref, out_ref, acc_ref):
    c = pl.program_id(0)                  # core-split index (0 / 1)
    j = pl.program_id(1)                  # reduction step along the sample rows

    @pl.when(j == 0)
    def _():
        acc_ref[...] = jnp.zeros_like(acc_ref)

    n_valid = scalars_ref[0]              # true (unpadded) sample count
    rows_half = scalars_ref[1]            # rows handled by each core slab

    l0 = logits_ref[0, 0].astype(jnp.float32)   # (R, 128) class-0 logits
    l1 = logits_ref[1, 0].astype(jnp.float32)   # (R, 128) class-1 logits
    t = targets_ref[0]                          # (R, 128) int32 targets

    rblk, lanes = t.shape
    row = jax.lax.broadcasted_iota(jnp.int32, (rblk, lanes), 0) + j * rblk
    lane = jax.lax.broadcasted_iota(jnp.int32, (rblk, lanes), 1)
    gidx = (c * rows_half + row) * lanes + lane
    valid = (row < rows_half) & (gidx < n_valid)   # mask pad + block overhang

    # Binary-margin form of the 2-class log-softmax (2 transcendentals + 1 divide).
    is_pos = t == 1
    z = l1 - l0
    s = jnp.where(is_pos, z, -z)                        # margin toward target class
    e = jnp.exp(-jnp.abs(s))
    logpt = jnp.minimum(s, 0.0) - jnp.log(1.0 + e)      # log p_t  (= logsigmoid(s))
    one_minus_pt = jnp.where(s >= 0, e, 1.0) / (1.0 + e)
    at = jnp.where(is_pos, jnp.float32(ALPHA), jnp.float32(1.0 - ALPHA))
    focal = -(one_minus_pt * one_minus_pt) * (logpt * at)   # gamma == 2 -> square

    contrib = jnp.where(valid, focal, 0.0)   # select (not multiply): kills OOB NaNs
    # Fold rows into the (8,128) accumulator: pure VALU vreg adds, no cross-lane work.
    acc_ref[...] += jnp.sum(contrib.reshape(rblk // 8, 8, lanes), axis=0)

    @pl.when(j == pl.num_programs(1) - 1)
    def _():
        # single cross-lane/sublane reduce, once per core
        out_ref[...] = jnp.sum(acc_ref[...], keepdims=True).reshape(1, 1, 1)


def focal_loss(logits, targets, *, tile_rows=4096):
    """logits: (N, 2) float, targets: (N,) int. Returns scalar float32 (mean focal loss)."""
    n, num_classes = logits.shape
    assert num_classes == 2, "FocalLoss with a float alpha is binary (C == 2)"
    assert tile_rows % 8 == 0

    # Samples -> (rows, 128) slabs: 128-sample groups on lanes, rows on sublanes.
    # rows is rounded to a multiple of 16 so it splits evenly across the 2-way core
    # axis into two slabs of rows_half rows each (rows_half is a multiple of 8).
    rows = (((n + 127) // 128 + 15) // 16) * 16
    rows_half = rows // 2
    n_pad = rows * 128

    if n_pad != n:
        logits = jnp.pad(logits, ((0, n_pad - n), (0, 0)))
        targets = jnp.pad(targets, (0, n_pad - n))

    # (class, core, rows_half, 128); pad + transpose + reshape fuse into one XLA copy.
    # TODO(synk): have the producer emit this layout directly to avoid even this copy.
    logits_l = logits.T.reshape(2, 2, rows_half, 128)
    targets_r = targets.astype(jnp.int32).reshape(2, rows_half, 128)

    r = min(tile_rows, rows_half)           # rows per grid step (multiple of 8)
    steps = (rows_half + r - 1) // r        # last step may overhang; masked in-kernel

    scalars = jnp.array([n, rows_half], dtype=jnp.int32)

    partial = pl.pallas_call(
        focal_loss_kernel,
        out_shape=jax.ShapeDtypeStruct((2, 1, 1), jnp.float32),
        grid_spec=pltpu.PrefetchScalarGridSpec(
            num_scalar_prefetch=1,
            grid=(2, steps),
            in_specs=[
                pl.BlockSpec((2, 1, r, 128), lambda c, j, s: (0, c, j, 0)),
                pl.BlockSpec((1, r, 128), lambda c, j, s: (c, j, 0)),
            ],
            out_specs=pl.BlockSpec((1, 1, 1), lambda c, j, s: (c, 0, 0)),
            scratch_shapes=[pltpu.VMEM((8, 128), jnp.float32)],
        ),
        compiler_params=pltpu.CompilerParams(
            dimension_semantics=("parallel", "arbitrary"),
            vmem_limit_bytes=40 * 1024 * 1024,
        ),
    )(scalars, logits_l, targets_r)

    # combine the per-core partial sums and take the mean
    return jnp.sum(partial) / n


def focal_loss_ref(logits, targets):
    """Pure-JAX reference matching the PyTorch module."""
    log_probs = jax.nn.log_softmax(logits.astype(jnp.float32), axis=-1)
    logpt = jnp.take_along_axis(
        log_probs, targets[:, None].astype(jnp.int32), axis=-1)[:, 0]
    pt = jnp.exp(logpt)
    alpha_vec = jnp.array([1.0 - ALPHA, ALPHA], dtype=jnp.float32)
    at = alpha_vec[targets]
    logpt = logpt * at
    loss = -((1.0 - pt) ** GAMMA) * logpt
    return jnp.mean(loss)


if __name__ == "__main__":
    key = jax.random.PRNGKey(0)
    k1, k2 = jax.random.split(key)

    N, C = 128, 2  # binary classification, as implied by alpha -> [1-alpha, alpha]
    logits = jax.random.normal(k1, (N, C), dtype=jnp.float32)
    targets = jax.random.randint(k2, (N,), 0, C, dtype=jnp.int32)

    out = jax.block_until_ready(focal_loss(logits, targets))
    ref = focal_loss_ref(logits, targets)
    assert jnp.allclose(out, ref, atol=1e-5, rtol=1e-5), (out, ref)

    # Non-aligned N with a small tile: exercises padding, the 2-way core split,
    # a multi-step reduction grid and a partially-overhanging last block.
    N2 = 5000
    k3, k4 = jax.random.split(k1)
    logits2 = jax.random.normal(k3, (N2, C), dtype=jnp.float32)
    targets2 = jax.random.randint(k4, (N2,), 0, C, dtype=jnp.int32)
    out2 = jax.block_until_ready(focal_loss(logits2, targets2, tile_rows=16))
    ref2 = focal_loss_ref(logits2, targets2)
    assert jnp.allclose(out2, ref2, atol=1e-5, rtol=1e-5), (out2, ref2)

    print("KERNEL_OK")
</pallas_src>

<mosaic_0001>
module attributes {stable_mosaic.version = 11 : i64} {
  func.func @focal_loss_kernel(%arg0: i32, %arg1: i32, %arg2: memref<2xi32, #tpu.memory_space<smem>>, %arg3: memref<2x1x8x128xf32, #tpu.memory_space<vmem>>, %arg4: memref<1x8x128xi32, #tpu.memory_space<vmem>>, %arg5: memref<1x1x1xf32, #tpu.memory_space<vmem>>, %arg6: memref<8x128xf32, #tpu.memory_space<vmem>>) attributes {dimension_semantics = [#tpu.dimension_semantics<parallel>, #tpu.dimension_semantics<arbitrary>], iteration_bounds = array<i64: 2, 1>, scalar_prefetch = 1 : i64, scratch_operands = 1 : i64, tpu.core_type = #tpu.core_type<tc>, window_params = [{transform_indices = @transform_0, window_bounds = array<i64: 2, 1, 8, 128>}, {transform_indices = @transform_1, window_bounds = array<i64: 1, 8, 128>}, {transform_indices = @transform_2, window_bounds = array<i64: 1, 1, 1>}]} {
    %c0_i32 = arith.constant 0 : i32
    %0 = arith.cmpi eq, %arg1, %c0_i32 : i32
    %1 = arith.extui %0 : i1 to i32
    %c0_i32_0 = arith.constant 0 : i32
    %2 = arith.cmpi ne, %1, %c0_i32_0 : i32
    scf.if %2 {
      %cst_29 = arith.constant 0.000000e+00 : f32
      %68 = vector.broadcast %cst_29 : f32 to vector<8x128xf32>
      %c0_30 = arith.constant 0 : index
      %c0_31 = arith.constant 0 : index
      %69 = vector.load %arg6[%c0_30, %c0_31] : memref<8x128xf32, #tpu.memory_space<vmem>>, vector<8x128xf32>
      tpu.vector_store %arg6[%c0_30, %c0_31], %68 {strides = array<i32>} : memref<8x128xf32, #tpu.memory_space<vmem>>, vector<8x128xf32>,
    } else {
    }
    %c0 = arith.constant 0 : index
    %3 = memref.load %arg2[%c0] : memref<2xi32, #tpu.memory_space<smem>>
    %c1 = arith.constant 1 : index
    %4 = memref.load %arg2[%c1] : memref<2xi32, #tpu.memory_space<smem>>
    %c0_1 = arith.constant 0 : index
    %c0_2 = arith.constant 0 : index
    %c0_3 = arith.constant 0 : index
    %c0_4 = arith.constant 0 : index
    %5 = vector.load %arg3[%c0_1, %c0_2, %c0_3, %c0_4] : memref<2x1x8x128xf32, #tpu.memory_space<vmem>>, vector<1x1x8x128xf32>
    %6 = vector.shape_cast %5 : vector<1x1x8x128xf32> to vector<8x128xf32>
    %c1_5 = arith.constant 1 : index
    %c0_6 = arith.constant 0 : index
    %c0_7 = arith.constant 0 : index
    %c0_8 = arith.constant 0 : index
    %7 = vector.load %arg3[%c1_5, %c0_6, %c0_7, %c0_8] : memref<2x1x8x128xf32, #tpu.memory_space<vmem>>, vector<1x1x8x128xf32>
    %8 = vector.shape_cast %7 : vector<1x1x8x128xf32> to vector<8x128xf32>
    %c0_9 = arith.constant 0 : index
    %c0_10 = arith.constant 0 : index
    %c0_11 = arith.constant 0 : index
    %9 = vector.load %arg4[%c0_9, %c0_10, %c0_11] : memref<1x8x128xi32, #tpu.memory_space<vmem>>, vector<1x8x128xi32>
    %10 = vector.shape_cast %9 : vector<1x8x128xi32> to vector<8x128xi32>
    %11 = tpu.iota {dimensions = array<i32: 0>} : vector<8x128xi32>
    %c8_i32 = arith.constant 8 : i32
    %12 = arith.muli %arg1, %c8_i32 : i32
    %13 = vector.broadcast %12 : i32 to vector<8x128xi32>
    %14 = arith.addi %11, %13 : vector<8x128xi32>
    %15 = tpu.iota {dimensions = array<i32: 1>} : vector<8x128xi32>
    %16 = arith.muli %arg0, %4 : i32
    %17 = vector.broadcast %16 : i32 to vector<8x128xi32>
    %18 = arith.addi %17, %14 : vector<8x128xi32>
    %c128_i32 = arith.constant 128 : i32
    %19 = vector.broadcast %c128_i32 : i32 to vector<8x128xi32>
    %20 = arith.muli %18, %19 : vector<8x128xi32>
    %21 = arith.addi %20, %15 : vector<8x128xi32>
    %22 = vector.broadcast %4 : i32 to vector<8x128xi32>
    %23 = arith.cmpi slt, %14, %22 : vector<8x128xi32>
    %24 = vector.broadcast %3 : i32 to vector<8x128xi32>
    %25 = arith.cmpi slt, %21, %24 : vector<8x128xi32>
    %26 = arith.andi %23, %25 : vector<8x128xi1>
    %c1_i32 = arith.constant 1 : i32
    %27 = vector.broadcast %c1_i32 : i32 to vector<8x128xi32>
    %28 = arith.cmpi eq, %10, %27 : vector<8x128xi32>
    %29 = arith.subf %8, %6 : vector<8x128xf32>
    %cst = arith.constant 0.000000e+00 : f32
    %30 = vector.broadcast %cst : f32 to vector<8x128xf32>
    %31 = arith.subf %30, %29 : vector<8x128xf32>
    %32 = arith.select %28, %29, %31 : vector<8x128xi1>, vector<8x128xf32>
    %33 = math.absf %32 : vector<8x128xf32>
    %cst_12 = arith.constant 0.000000e+00 : f32
    %34 = vector.broadcast %cst_12 : f32 to vector<8x128xf32>
    %35 = arith.subf %34, %33 : vector<8x128xf32>
    %36 = math.exp %35 : vector<8x128xf32>
    %cst_13 = arith.constant 0.000000e+00 : f32
    %37 = vector.broadcast %cst_13 : f32 to vector<8x128xf32>
    %38 = arith.minimumf %32, %37 : vector<8x128xf32>
    %cst_14 = arith.constant 1.000000e+00 : f32
    %39 = vector.broadcast %cst_14 : f32 to vector<8x128xf32>
    %40 = arith.addf %39, %36 : vector<8x128xf32>
    %41 = math.log %40 : vector<8x128xf32>
    %42 = arith.subf %38, %41 : vector<8x128xf32>
    %cst_15 = arith.constant 0.000000e+00 : f32
    %43 = vector.broadcast %cst_15 : f32 to vector<8x128xf32>
    %44 = arith.cmpf oge, %32, %43 : vector<8x128xf32>
    %cst_16 = arith.constant 1.000000e+00 : f32
    %45 = vector.broadcast %cst_16 : f32 to vector<8x128xf32>
    %46 = arith.select %44, %36, %45 : vector<8x128xi1>, vector<8x128xf32>
    %cst_17 = arith.constant 1.000000e+00 : f32
    %47 = vector.broadcast %cst_17 : f32 to vector<8x128xf32>
    %48 = arith.addf %47, %36 : vector<8x128xf32>
    %49 = arith.divf %46, %48 : vector<8x128xf32>
    %cst_18 = arith.constant 7.500000e-01 : f32
    %cst_19 = arith.constant 2.500000e-01 : f32
    %50 = vector.broadcast %cst_18 : f32 to vector<8x128xf32>
    %51 = vector.broadcast %cst_19 : f32 to vector<8x128xf32>
    %52 = arith.select %28, %50, %51 : vector<8x128xi1>, vector<8x128xf32>
    %53 = arith.mulf %49, %49 : vector<8x128xf32>
    %cst_20 = arith.constant 0.000000e+00 : f32
    %54 = vector.broadcast %cst_20 : f32 to vector<8x128xf32>
    %55 = arith.subf %54, %53 : vector<8x128xf32>
    %56 = arith.mulf %42, %52 : vector<8x128xf32>
    %57 = arith.mulf %55, %56 : vector<8x128xf32>
    %cst_21 = arith.constant 0.000000e+00 : f32
    %58 = vector.broadcast %cst_21 : f32 to vector<8x128xf32>
    %59 = arith.select %26, %57, %58 : vector<8x128xi1>, vector<8x128xf32>
    %c0_22 = arith.constant 0 : index
    %c0_23 = arith.constant 0 : index
    %60 = vector.load %arg6[%c0_22, %c0_23] : memref<8x128xf32, #tpu.memory_space<vmem>>, vector<8x128xf32>
    %61 = vector.shape_cast %59 : vector<8x128xf32> to vector<1x8x128xf32>
    %cst_24 = arith.constant dense<0.000000e+00> : vector<8x128xf32>
    %62 = vector.multi_reduction <add>, %61, %cst_24 [0] : vector<1x8x128xf32> to vector<8x128xf32>
    %63 = arith.addf %60, %62 : vector<8x128xf32>
    %c0_25 = arith.constant 0 : index
    %c0_26 = arith.constant 0 : index
    %64 = vector.load %arg6[%c0_25, %c0_26] : memref<8x128xf32, #tpu.memory_space<vmem>>, vector<8x128xf32>
    tpu.vector_store %arg6[%c0_25, %c0_26], %63 {strides = array<i32>} : memref<8x128xf32, #tpu.memory_space<vmem>>, vector<8x128xf32>,
    %c0_i32_27 = arith.constant 0 : i32
    %65 = arith.cmpi eq, %arg1, %c0_i32_27 : i32
    %66 = arith.extui %65 : i1 to i32
    %c0_i32_28 = arith.constant 0 : i32
    %67 = arith.cmpi ne, %66, %c0_i32_28 : i32
    scf.if %67 {
      %c0_29 = arith.constant 0 : index
      %c0_30 = arith.constant 0 : index
      %68 = vector.load %arg6[%c0_29, %c0_30] : memref<8x128xf32, #tpu.memory_space<vmem>>, vector<8x128xf32>
      %69 = vector.shape_cast %68 : vector<8x128xf32> to vector<1x8x128xf32>
      %cst_31 = arith.constant dense<0.000000e+00> : vector<1xf32>
      %70 = vector.multi_reduction <add>, %69, %cst_31 [1, 2] : vector<1x8x128xf32> to vector<1xf32>
      %71 = vector.shape_cast %70 : vector<1xf32> to vector<1x1x1xf32>
      %72 = vector.extract %71[0, 0, 0] : f32 from vector<1x1x1xf32>
      %73 = vector.broadcast %72 : f32 to vector<1x1xf32>
      %74 = vector.shape_cast %73 : vector<1x1xf32> to vector<1x1x1xf32>
      %c0_32 = arith.constant 0 : index
      %c0_33 = arith.constant 0 : index
      %c0_34 = arith.constant 0 : index
      %75 = vector.load %arg5[%c0_32, %c0_33, %c0_34] : memref<1x1x1xf32, #tpu.memory_space<vmem>>, vector<1x1x1xf32>
      tpu.vector_store %arg5[%c0_32, %c0_33, %c0_34], %74 {strides = array<i32>} : memref<1x1x1xf32, #tpu.memory_space<vmem>>, vector<1x1x1xf32>,
    } else {
    }
    return
  }
  func.func @transform_0(%arg0: i32, %arg1: i32, %arg2: memref<2xi32, #tpu.memory_space<smem>>) -> (i32, i32, i32, i32) {
    %c0_i32 = arith.constant 0 : i32
    %c0_i32_0 = arith.constant 0 : i32
    %c0_i32_1 = arith.constant 0 : i32
    return %c0_i32, %arg0, %arg1, %c0_i32_0 : i32, i32, i32, i32
  }
  func.func @transform_1(%arg0: i32, %arg1: i32, %arg2: memref<2xi32, #tpu.memory_space<smem>>) -> (i32, i32, i32) {
    %c0_i32 = arith.constant 0 : i32
    %c0_i32_0 = arith.constant 0 : i32
    return %arg0, %arg1, %c0_i32 : i32, i32, i32
  }
  func.func @transform_2(%arg0: i32, %arg1: i32, %arg2: memref<2xi32, #tpu.memory_space<smem>>) -> (i32, i32, i32) {
    %c0_i32 = arith.constant 0 : i32
    %c0_i32_0 = arith.constant 0 : i32
    %c0_i32_1 = arith.constant 0 : i32
    return %arg0, %c0_i32, %c0_i32_0 : i32, i32, i32
  }
}

</mosaic_0001>

<llo_original>
// kernel: tpu_custom_call.1
$region0: #{tpu_custom_call.1}
  #allocation0 [shape = 'u32[]', space=smem, size = 0x4, offset = 0x4, fixed_abs, tag = 'smem constant byte address 0x4 - core index']
  #allocation1 [shape = 'u32[72,128]{1,0:T(1,128)}', space=vmem, size = 0x9000, scoped, tag = 'internal scratch']
  #allocation2 [shape = 'f32[8,128]{1,0:T(8,128)}', space=vmem, size = 0x1000, scoped, tag = 'scratch operand']
  #allocation3 [shape = 's32[1]{0}', space=sflag, size = 0x4, scoped, tag = 'scoped memory for tpu_custom_call.1']
  #allocation4 [shape = 'u8[512]{0}', space=smem, size = 0x200, scoped, tag = 'prefetched SMEM operand 0']
  %s0 = inlined_call_operand.hbm [shape: s32[2], index: 0, kind: input, shape index: {}]
  %s1 = inlined_call_operand.hbm [shape: f32[2,2,8,128], index: 1, kind: input, shape index: {}]
  %s2 = inlined_call_operand.hbm [shape: s32[2,8,128], index: 2, kind: input, shape index: {}]
  %s3 = inlined_call_operand.vmem [shape: f32[2,1,1], index: 3, kind: output, shape index: {}]
  %s4 = sld [smem:[#allocation0]]
  $region57: #{tpu_custom_call.1} parent=0
    _
  %s6 = ssub.s32 1, %s4
  %s7 = scalar_select 0, %s6, %s4
  %s9 = sshll.u32 %s0, 4
  %s10 = int_to_ptr.hbm [resolvable:$true] %s9
  %12 = dma.hbm_to_smem %s10, 16, [#allocation4], [#allocation3]
  %14 = dma.done [#allocation3], 16
  %15 = sfence
  $region1: #{tpu_custom_call.1} parent=0
    #allocation5 [shape = 'u8[16384]{0}', space=vmem, size = 0x4000, scoped, tag = 'input window, operand 1']
    #allocation6 [shape = 's32[2]{0}', space=sflag, size = 0x8, scoped, tag = 'scoped memory for tpu_custom_call.1']
    #allocation7 [shape = 'u8[8192]{0}', space=vmem, size = 0x2000, scoped, tag = 'input window, operand 2']
    #allocation8 [shape = 's32[2]{0}', space=sflag, size = 0x8, scoped, tag = 'scoped memory for tpu_custom_call.1']
    %16 = vsyncpa [#allocation6], 0
    %s17 = scalar_lea.sflag [#allocation6], 1
    %18 = vsyncpa %s17, 0
    %19 = vsyncpa [#allocation8], 0
    %s20 = scalar_lea.sflag [#allocation8], 1
    %21 = vsyncpa %s20, 0
    loop: start=0, step=1, limit=4
    $region2: #{tpu_custom_call.1} parent=1 // loop_pre_header
      _
    $region3: #{tpu_custom_call.1} parent=1 // loop_header
      %s23 = sphi 0, %s27
      %p24 = scmp.ge.s32.totalorder %s23, 4
      %s30 = sphi 0, %s42
      %s31 = sphi 0, %s38
      %s32 = sphi 0, %s30
      %s33 = sphi 0, %s31
      %s34 = sphi 0, %s32
      %s35 = sphi 0, %s33
      %s47 = sphi 0, %s49
      %s50 = sphi 0, %s47
      %s51 = sphi 0, %s50
      %s67 = sphi 0, %s51
      %s75 = sphi 0, %s77
      %s78 = sphi 0, %s75
      %s79 = sphi 0, %s78
      %s95 = sphi 0, %s79
      %s101 = sphi 0, %s103
      %s104 = sphi 0, %s101
      %s105 = sphi 0, %s104
      %s121 = sphi 0, %s105
    $region4: #{tpu_custom_call.1} parent=1 // loop_header_branch
      %26 = sbr.rel (%p24) target = $region8
    $region5: #{tpu_custom_call.1} parent=1 // loop_body
      %s28 = ssub.s32 %s23, 1
      %s29 = ssub.s32 %s23, 2
      %s36 = sadd.s32 1, %s31
      %p37 = scmp.ge.s32.totalorder %s36, 1
      %s38 = scalar_select %p37, 0, %s36
      %s39 = sadd.s32 1, %s30
      %s40 = scalar_select %p37, %s39, %s30
      %p41 = scmp.ge.s32.totalorder %s40, 2
      %s42 = scalar_select %p41, 0, %s40
      %s43 = ssub.s32 %s30, %s42
      %s44 = ssub.s32 %s31, %s38
      %s45 = sor.u32 %s43, %s44
      %p46 = scmp.eq.s32.totalorder %s45, 0
      %s48 = sadd.s32 %s47, 1
      %s49 = scalar_select %p46, %s47, %s48
      %p52 = pneg %p46
      %p53 = scmp.eq.s32.totalorder %s23, 1
      %p54 = por %p52, %p53
      %p55 = scmp.ne.s32.totalorder %s47, %s50
      %p56 = scmp.eq.s32.totalorder %s23, 0
      %p57 = por %p55, %p56
      %p58 = scmp.ne.s32.totalorder %s47, %s50
      %p59 = scmp.eq.s32.totalorder %s28, 1
      %p60 = por %p58, %p59
      %p61 = scmp.ne.s32.totalorder %s50, %s51
      %p62 = scmp.eq.s32.totalorder %s28, 0
      %p63 = por %p61, %p62
      %p64 = scmp.ne.s32.totalorder %s50, %s51
      %p65 = scmp.eq.s32.totalorder %s29, 1
      %p66 = por %p64, %p65
      %p68 = scmp.ne.s32.totalorder %s51, %s67
      %p69 = scmp.eq.s32.totalorder %s29, 0
      %p70 = por %p68, %p69
      %s71 = ssub.s32 %s30, %s42
      %s72 = ssub.s32 %s31, %s38
      %s73 = sor.u32 %s71, %s72
      %p74 = scmp.eq.s32.totalorder %s73, 0
      %s76 = sadd.s32 %s75, 1
      %s77 = scalar_select %p74, %s75, %s76
      %p80 = pneg %p74
      %p81 = scmp.eq.s32.totalorder %s23, 1
      %p82 = por %p80, %p81
      %p83 = scmp.ne.s32.totalorder %s75, %s78
      %p84 = scmp.eq.s32.totalorder %s23, 0
      %p85 = por %p83, %p84
      %p86 = scmp.ne.s32.totalorder %s75, %s78
      %p87 = scmp.eq.s32.totalorder %s28, 1
      %p88 = por %p86, %p87
      %p89 = scmp.ne.s32.totalorder %s78, %s79
      %p90 = scmp.eq.s32.totalorder %s28, 0
      %p91 = por %p89, %p90
      %p92 = scmp.ne.s32.totalorder %s78, %s79
      %p93 = scmp.eq.s32.totalorder %s29, 1
      %p94 = por %p92, %p93
      %p96 = scmp.ne.s32.totalorder %s79, %s95
      %p97 = scmp.eq.s32.totalorder %s29, 0
      %p98 = por %p96, %p97
      %s99 = ssub.s32 %s30, %s42
      %p100 = scmp.eq.s32.totalorder %s99, 0
      %s102 = sadd.s32 %s101, 1
      %s103 = scalar_select %p100, %s101, %s102
      %p106 = pneg %p100
      %p107 = scmp.eq.s32.totalorder %s23, 1
      %p108 = por %p106, %p107
      %p109 = scmp.ne.s32.totalorder %s101, %s104
      %p110 = scmp.eq.s32.totalorder %s23, 0
      %p111 = por %p109, %p110
      %p112 = scmp.ne.s32.totalorder %s101, %s104
      %p113 = scmp.eq.s32.totalorder %s28, 1
      %p114 = por %p112, %p113
      %p115 = scmp.ne.s32.totalorder %s104, %s105
      %p116 = scmp.eq.s32.totalorder %s28, 0
      %p117 = por %p115, %p116
      %p118 = scmp.ne.s32.totalorder %s104, %s105
      %p119 = scmp.eq.s32.totalorder %s29, 1
      %p120 = por %p118, %p119
      %p122 = scmp.ne.s32.totalorder %s105, %s121
      %p123 = scmp.eq.s32.totalorder %s29, 0
      %p124 = por %p122, %p123
      %p125 = scmp.le.s32.totalorder 1, %s23
      %p126 = scmp.lt.s32.totalorder %s23, 3
      %p127 = pnand %p125, %p126
      %p128 = pneg %p127
      // Predicated region
      $region9: #{tpu_custom_call.1} parent=5 // pred_check
        _
      $region10: #{tpu_custom_call.1} parent=5 // pred_check_branch
        %130 = sbr.rel (%p127) target = $region12
      $region11: #{tpu_custom_call.1} parent=5 // pred_region
        %s131 = ssub.s32 %s23, 1
      $region12: #{tpu_custom_call.1} parent=5 // pred_fallthru
        _
      %p132 = scmp.lt.s32.totalorder %s23, 2
      // Predicated region
      $region13: #{tpu_custom_call.1} parent=5 // pred_check
        %p133 = pneg %p132
      $region14: #{tpu_custom_call.1} parent=5 // pred_check_branch
        %135 = sbr.rel (%p133) target = $region16
      $region15: #{tpu_custom_call.1} parent=5 // pred_region
        // Predicated region
        $region17: #{tpu_custom_call.1} parent=15 // pred_check
          %p136 = pneg %p57
        $region18: #{tpu_custom_call.1} parent=15 // pred_check_branch
          %138 = sbr.rel (%p136) target = $region20
        $region19: #{tpu_custom_call.1} parent=15 // pred_region
          %s139 = sand.u32 %s47, 1
          %s140 = scalar_lea.sflag [#allocation6], %s139
          %s141 = sand.u32 %s47, 1
          %s142 = smul.addr %s141, 16
          %s143 = scalar_lea.vmem [#allocation5], %s142
          %145 = vsyncadd %s140, 0
          %s146 = sadd.s32 %s31, %s30
          %s147 = smul.addr %s146, 8
          %s148 = scalar_lea.hbm %s1, %s147
          %s149 = sshll.u32 %s148, 4
          %s150 = int_to_ptr.hbm [resolvable:$true] %s149
          %s151 = sshll.u32 %s143, 4
          %s152 = int_to_ptr.vmem [resolvable:$true] %s151
          %157 = dma.hbm_to_vmem [thread:$0]  %s150, 256, %s152, %s140, 256, 128, 8
        $region20: #{tpu_custom_call.1} parent=15 // pred_fallthru
          _
        // Predicated region
        $region21: #{tpu_custom_call.1} parent=15 // pred_check
          %p158 = pneg %p85
        $region22: #{tpu_custom_call.1} parent=15 // pred_check_branch
          %160 = sbr.rel (%p158) target = $region24
        $region23: #{tpu_custom_call.1} parent=15 // pred_region
          %s161 = sand.u32 %s75, 1
          %s162 = scalar_lea.sflag [#allocation8], %s161
          %s163 = sand.u32 %s75, 1
          %s164 = smul.addr %s163, 8
          %s165 = scalar_lea.vmem [#allocation7], %s164
          %167 = vsyncadd %s162, 0
          %s168 = sadd.s32 %s31, %s30
          %s169 = smul.addr %s168, 8
          %s170 = scalar_lea.hbm %s2, %s169
          %s172 = sshll.u32 %s170, 4
          %s173 = int_to_ptr.hbm [resolvable:$true] %s172
          %s174 = sshll.u32 %s165, 4
          %s175 = int_to_ptr.vmem [resolvable:$true] %s174
          %177 = dma.hbm_to_vmem [thread:$0]  %s173, 128, %s175, %s162
        $region24: #{tpu_custom_call.1} parent=15 // pred_fallthru
          _
      $region16: #{tpu_custom_call.1} parent=5 // pred_fallthru
        _
      %p178 = scmp.le.s32.totalorder 1, %s23
      %p179 = scmp.lt.s32.totalorder %s23, 3
      %p180 = pnand %p178, %p179
      %p181 = pneg %p180
      // Predicated region
      $region25: #{tpu_custom_call.1} parent=5 // pred_check
        _
      $region26: #{tpu_custom_call.1} parent=5 // pred_check_branch
        %183 = sbr.rel (%p180) target = $region28
      $region27: #{tpu_custom_call.1} parent=5 // pred_region
        %s184 = ssub.s32 %s23, 1
        %s185 = sand.u32 %s50, 1
        %s186 = scalar_lea.sflag [#allocation6], %s185
        %s187 = sand.u32 %s50, 1
        %s188 = smul.addr %s187, 16
        %s189 = scalar_lea.vmem [#allocation5], %s188
        // Predicated region
        $region29: #{tpu_custom_call.1} parent=27 // pred_check
          %p190 = pneg %p63
        $region30: #{tpu_custom_call.1} parent=27 // pred_check_branch
          %192 = sbr.rel (%p190) target = $region32
        $region31: #{tpu_custom_call.1} parent=27 // pred_region
          %194 = dma.done %s186, 256
        $region32: #{tpu_custom_call.1} parent=27 // pred_fallthru
          _
        %s195 = sand.u32 %s78, 1
        %s196 = scalar_lea.sflag [#allocation8], %s195
        %s197 = sand.u32 %s78, 1
        %s198 = smul.addr %s197, 8
        %s199 = scalar_lea.vmem [#allocation7], %s198
        // Predicated region
        $region33: #{tpu_custom_call.1} parent=27 // pred_check
          %p200 = pneg %p91
        $region34: #{tpu_custom_call.1} parent=27 // pred_check_branch
          %202 = sbr.rel (%p200) target = $region36
        $region35: #{tpu_custom_call.1} parent=27 // pred_region
          %204 = dma.done %s196, 128
        $region36: #{tpu_custom_call.1} parent=27 // pred_fallthru
          _
        %s205 = sand.u32 %s50, 1
        %s206 = scalar_lea.sflag [#allocation6], %s205
        %s207 = sand.u32 %s50, 1
        %s208 = smul.addr %s207, 16
        %s209 = scalar_lea.vmem [#allocation5], %s208
        %p210 = pneg %p63
        %p211 = pneg %p60
        %s212 = sand.u32 %s78, 1
        %s213 = scalar_lea.sflag [#allocation8], %s212
        %s214 = sand.u32 %s78, 1
        %s215 = smul.addr %s214, 8
        %s216 = scalar_lea.vmem [#allocation7], %s215
        %p217 = pneg %p91
        %p218 = pneg %p88
        %p219 = pneg %p117
        %p220 = pneg %p114
        %p221 = scmp.lt.s32.totalorder %s32, 1
        %s222 = scalar_select %p221, %s32, 1
        %s223 = scalar_lea.vmem %s3, %s222
        %p224 = scmp.lt.s32.totalorder %s32, 1
        %s225 = scalar_select %p224, %s32, 1
        %s226 = scalar_lea.vmem %s3, %s225
        %p227 = scmp.eq.s32.totalorder %s33, 0
        // Predicated region
        $region37: #{tpu_custom_call.1} parent=27 // pred_check
          %p228 = pneg %p227
        $region38: #{tpu_custom_call.1} parent=27 // pred_check_branch
          %230 = sbr.rel (%p228) target = $region40
        $region39: #{tpu_custom_call.1} parent=27 // pred_region
          %231 = vst [vmem:[#allocation2] sm:$0xff] 0.0
        $region40: #{tpu_custom_call.1} parent=27 // pred_fallthru
          _
        %s232 = sld [smem:[#allocation4]]
        %s233 = sld [smem:[#allocation4 + $0x1]]
        %v234 = vld [vmem:[%s189] sm:$0xff]
        %s235 = scalar_lea.vmem %s189, 8 [#allocation5]
        %v236 = vld [vmem:[%s235] sm:$0xff]
        %v237 = vld [vmem:[%s199] sm:$0xff]
        %v238 = vlaneseq
        %v239 = vshrl.u32 %v238, 7
        %s240 = smul.u32 %s33, 8
        %v241 = vstv %s240
        %v242 = vadd.s32 %v239, %v241
        %v243 = vlaneseq
        %v244 = vand.u32 %v243, 127
        %s245 = smul.u32 %s32, %s233
        %v246 = vstv %s245
        %v247 = vadd.s32 %v246, %v242
        %v248 = vmul.u32 %v247, 128
        %v249 = vadd.s32 %v248, %v244
        %v250 = vstv %s233
        %vm251 = vcmp.lt.s32.totalorder %v242, %v250
        %v252 = vstv %s232
        %vm253 = vcmp.lt.s32.totalorder %v249, %v252
        %vm254 = vmand %vm251, %vm253
        %vm255 = vcmp.eq.s32.totalorder %v237, 1
        %v256 = vsub.f32 %v236, %v234
        %v257 = vsub.f32 0.0, %v256
        %v258 = vsel %vm255, %v256, %v257
        %v259 = vand.u32 2147483647, %v258
        %v260 = vsub.f32 0.0, %v259
        %v261 = vmul.f32 %v260, 1.442695
        %v262 = vpow.pop %v261
        %v263 = vmin.f32 %v258, 0.0
        %v264 = vadd.f32 %v262, 1.0
        %v265 = vlog2.pop %v264
        %v266 = vmul.f32 %v265, 0.6931472
        %v267 = vsub.f32 %v263, %v266
        %vm268 = vcmp.ge.f32.partialorder %v258, 0.0
        %v269 = vsel %vm268, %v262, 1.0
        %v270 = vrcp.pop %v264
        %v271 = vmul.f32 %v264, %v270
        %v272 = vsub.f32 1.0, %v271
        %v273 = vmul.f32 %v270, %v272
        %v274 = vadd.f32 %v270, %v273
        %vm275 = vweird.f32 %v264
        %vm276 = vweird.f32 %v270
        %vm277 = vmor %vm275, %vm276
        %v278 = vsel %vm277, %v270, %v274
        %v279 = vand.u32 2147483647, %v264
        %vm280 = vcmp.eq.f32.partialorder %v279, 8.507059e+37
        %v281 = vand.u32 %v264, 2147483648
        %v282 = vor.u32 1.1754944e-38, %v281
        %v283 = vsel %vm280, %v282, %v278
        %v284 = vmul.f32 %v269, %v283
        %v285 = vsel %vm255, 0.75, 0.25
        %v286 = vmul.f32 %v284, %v284
        %v287 = vsub.f32 0.0, %v286
        %v288 = vmul.f32 %v267, %v285
        %v289 = vmul.f32 %v287, %v288
        %v290 = vsel %vm254, %v289, 0.0
        %v291 = vld [vmem:[#allocation2] sm:$0xff]
        %v292 = vadd.f32 %v290, 0.0
        %v293 = vadd.f32 %v291, %v292
        %294 = vst [vmem:[#allocation2] sm:$0xff] %v293
        // Predicated region
        $region41: #{tpu_custom_call.1} parent=27 // pred_check
          %p295 = pneg %p227
        $region42: #{tpu_custom_call.1} parent=27 // pred_check_branch
          %297 = sbr.rel (%p295) target = $region44
        $region43: #{tpu_custom_call.1} parent=27 // pred_region
          %v298 = vld [vmem:[#allocation2] sm:$0xff]
          %299 = vadd.xlane.f32.xlu0 %v298
          %v300 = vpop.xlane.xlu0 %299
          %v301 = vrot.slane %v300, 4
          %v302 = vadd.f32 %v300, %v301
          %v303 = vrot.slane %v302, 2
          %v304 = vadd.f32 %v302, %v303
          %v305 = vrot.slane %v304, 1
          %v306 = vadd.f32 %v304, %v305
          %s307 = vtos %v306
          %v308 = vstv %s307
          %vm309 = vcmask 0
          %310 = vst.msk [vmem:[%s226] sm:$0x1] %vm309, %v308
        $region44: #{tpu_custom_call.1} parent=27 // pred_fallthru
          _
        %p311 = scmp.lt.s32.totalorder %s32, 1
        %s312 = scalar_select %p311, %s32, 1
        %s313 = scalar_lea.vmem %s3, %s312
        // Predicated region
        $region45: #{tpu_custom_call.1} parent=27 // pred_check
          %p314 = pneg %p114
        $region46: #{tpu_custom_call.1} parent=27 // pred_check_branch
          %316 = sbr.rel (%p314) target = $region48
        $region47: #{tpu_custom_call.1} parent=27 // pred_region
          _
        $region48: #{tpu_custom_call.1} parent=27 // pred_fallthru
          _
      $region28: #{tpu_custom_call.1} parent=5 // pred_fallthru
        _
      %p317 = scmp.le.s32.totalorder 2, %s23
      // Predicated region
      $region49: #{tpu_custom_call.1} parent=5 // pred_check
        %p318 = pneg %p317
      $region50: #{tpu_custom_call.1} parent=5 // pred_check_branch
        %320 = sbr.rel (%p318) target = $region52
      $region51: #{tpu_custom_call.1} parent=5 // pred_region
        %s321 = ssub.s32 %s23, 2
        // Predicated region
        $region53: #{tpu_custom_call.1} parent=51 // pred_check
          %p322 = pneg %p120
        $region54: #{tpu_custom_call.1} parent=51 // pred_check_branch
          %324 = sbr.rel (%p322) target = $region56
        $region55: #{tpu_custom_call.1} parent=51 // pred_region
          %p325 = scmp.lt.s32.totalorder %s34, 1
          %s326 = scalar_select %p325, %s34, 1
          %s327 = scalar_lea.vmem %s3, %s326
        $region56: #{tpu_custom_call.1} parent=51 // pred_fallthru
          _
      $region52: #{tpu_custom_call.1} parent=5 // pred_fallthru
        _
    $region6: #{tpu_custom_call.1} parent=1 // loop_footer
      %s27 = sadd.s32 1, %s23
    $region7: #{tpu_custom_call.1} parent=1 // loop_footer_branch
      %22 = sbr.rel target = $region3
    $region8: #{tpu_custom_call.1} parent=1 // loop_exit
      _
    %328 = vsyncpa [#allocation6], 1
    %s329 = scalar_lea.sflag [#allocation6], 1
    %330 = vsyncpa %s329, 1
    %331 = vsyncpa [#allocation8], 1
    %s332 = scalar_lea.sflag [#allocation8], 1
    %333 = vsyncpa %s332, 1

</llo_original>
